<compile_context>
chip_gen: v7x
topology: tpu7x:2x2x1
jax: 0.10.0
libtpu: 0.0.40
codegen_flags: <defaults>
</compile_context>

<pallas_src>
import functools

import jax
import jax.numpy as jnp
from jax import lax
from jax.experimental import pallas as pl
from jax.experimental.pallas import tpu as pltpu

HIGH = jax.lax.Precision.HIGHEST   # used only in the pure-JAX reference
LN_EPS = 1e-5                      # nn.TransformerEncoderLayer layer_norm_eps default
BN_EPS = 1e-5                      # nn.BatchNorm default eps

_N_PE = 5     # pe1_w, pe_bn_scale, pe_bn_shift, pe2_w, pe2_b
_N_TR = 16    # wq, bq, wk, bk, wv, bv, wo, bo, ln1_g, ln1_b, w1, b1, w2, b2, ln2_g, ln2_b


def _layernorm(x, g, b, eps=LN_EPS):
    mu = jnp.mean(x, axis=-1, keepdims=True)
    xc = x - mu
    var = jnp.mean(xc * xc, axis=-1, keepdims=True)
    return xc * lax.rsqrt(var + eps) * g + b


# ---------------------------------------------------------------------------
# tile-size helpers
# ---------------------------------------------------------------------------
def _row_tile(m, cap=1024):
    """Row tile: large (mem-bound kernels), multiple of 8, and >=2 grid steps when possible."""
    cap = min(cap, max(8, m // 2))
    if m <= cap:
        return m
    for t in range(cap - cap % 8, 7, -8):
        if m % t == 0:
            return t
    # TODO(synk): awkward M with no divisor <= cap should be padded instead of falling back to M.
    return m


def _largest_divisor_leq(n, cap):
    for t in range(min(n, cap), 0, -1):
        if n % t == 0:
            return t
    return 1


def _seq_tile(bt, s, cap):
    """#sequences per grid step: cap, VMEM budget for (tb,S,S) attention tiles, >=2 grid steps."""
    vmem_rows = max(1, (4 << 20) // (s * s * 4))
    cap = max(1, min(cap, vmem_rows, max(1, bt // 2)))
    return _largest_divisor_leq(bt, cap)


def _query_tile(n, cap):
    cap = min(cap, n)
    for t in range(cap - cap % 8, 7, -8):
        if n % t == 0:
            return t
    return n


def _bcast_spec(arr):
    """Constant-index BlockSpec for a weight operand (default-arg trick avoids late binding)."""
    idx = (0,) * arr.ndim
    return pl.BlockSpec(arr.shape, lambda i, _idx=idx: _idx)


# ---------------------------------------------------------------------------
# Kernel 1: fused 1x1-conv (matmul) + folded BatchNorm + optional ReLU
# ---------------------------------------------------------------------------
def _linear_affine_kernel(x_ref, w_ref, scale_ref, shift_ref, o_ref, *, relu):
    z = jnp.dot(x_ref[...].astype(jnp.bfloat16), w_ref[...],
                preferred_element_type=jnp.float32)
    z = z * scale_ref[...] + shift_ref[...]
    if relu:
        z = jnp.maximum(z, 0.0)
    o_ref[...] = z.astype(o_ref.dtype)


def linear_affine(x, w, scale, shift, *, relu, out_dtype=jnp.bfloat16):
    """act((x @ w) * scale + shift).  x: (M, Cin) f32, w: (Cin, Cout) (cast to bf16)."""
    M, Cin = x.shape
    Cout = w.shape[1]
    tm = _row_tile(M)
    return pl.pallas_call(
        functools.partial(_linear_affine_kernel, relu=relu),
        out_shape=jax.ShapeDtypeStruct((M, Cout), out_dtype),
        grid=(M // tm,),
        in_specs=[
            pl.BlockSpec((tm, Cin), lambda i: (i, 0)),
            pl.BlockSpec((Cin, Cout), lambda i: (0, 0)),
            pl.BlockSpec((1, Cout), lambda i: (0, 0)),
            pl.BlockSpec((1, Cout), lambda i: (0, 0)),
        ],
        out_specs=pl.BlockSpec((tm, Cout), lambda i: (i, 0)),
        compiler_params=pltpu.CompilerParams(dimension_semantics=("parallel",)),
    )(x, w.astype(jnp.bfloat16), jnp.reshape(scale, (1, Cout)), jnp.reshape(shift, (1, Cout)))


# ---------------------------------------------------------------------------
# Shared in-kernel pieces: position-encoding chain and TransformerEncoderLayer core
# ---------------------------------------------------------------------------
def _pe_chain(xyz2, pe_refs):
    """relu(bn(xyz @ w1)) @ w2 + b2.  xyz2: (M, 3) f32 -> (M, C) f32 (kept f32: K=3 matmuls)."""
    w1, s1, sh1, w2, b2 = (r[...] for r in pe_refs)
    z = jnp.dot(xyz2, w1, preferred_element_type=jnp.float32)
    z = jnp.maximum(z * s1 + sh1, 0.0)
    return jnp.dot(z, w2, preferred_element_type=jnp.float32) + b2


def _transformer_core(x, tr):
    """x: (TB, S, D) f32.  tr: 16 refs (per-head qkv/wo + ffn weights in bf16, affine in f32).

    Post-norm nn.TransformerEncoderLayer (relu activation, dropout=0). Returns (TB*S, D) f32.
    """
    (wq, bq, wk, bk, wv, bv, wo, bo, g1, b1, w1, bf1, w2, bf2, g2, b2) = tr
    TB, S, D = x.shape
    nhead, _, dh = wq.shape

    x2 = x.reshape(TB * S, D)
    xb = x2.astype(jnp.bfloat16)

    # Per-head weight slabs (pre-split in the wrapper) -> no lane-axis slicing of qkv and no
    # lane concat of head outputs; out-projection is accumulated per head.
    attn = jnp.zeros((TB * S, D), jnp.float32)
    for h in range(nhead):                                               # static unroll, nhead=4
        q = (jnp.dot(xb, wq[h], preferred_element_type=jnp.float32) + bq[h]).reshape(TB, S, dh)
        k = (jnp.dot(xb, wk[h], preferred_element_type=jnp.float32) + bk[h]).reshape(TB, S, dh)
        v = (jnp.dot(xb, wv[h], preferred_element_type=jnp.float32) + bv[h]).reshape(TB, S, dh)
        s = jnp.einsum("bqd,bkd->bqk", q, k, preferred_element_type=jnp.float32)
        s = s - jnp.max(s, axis=-1, keepdims=True)
        e = jnp.exp(s)
        a = e * pl.reciprocal(jnp.sum(e, axis=-1, keepdims=True), approx=True)
        ctx = jnp.einsum("bqk,bkd->bqd", a, v, preferred_element_type=jnp.float32)
        attn = attn + jnp.dot(ctx.reshape(TB * S, dh).astype(jnp.bfloat16), wo[h],
                              preferred_element_type=jnp.float32)
    attn = attn + bo[...]

    h1 = _layernorm(x2 + attn, g1[...], b1[...])                          # norm1(x + self_attn)
    f = jnp.maximum(jnp.dot(h1.astype(jnp.bfloat16), w1[...],
                            preferred_element_type=jnp.float32) + bf1[...], 0.0)
    f = jnp.dot(f.astype(jnp.bfloat16), w2[...],
                preferred_element_type=jnp.float32) + bf2[...]
    return _layernorm(h1 + f, g2[...], b2[...])                           # (TB*S, D)


# ---------------------------------------------------------------------------
# Kernel 2: local path -- pe + (feat+pe) + transformer + max_ns + fc + bn_l + relu
# ---------------------------------------------------------------------------
def _transformer_local_kernel(feat_ref, xyz_ref, *refs):
    o_ref = refs[-1]
    pe_refs = refs[:_N_PE]
    tr_refs = refs[_N_PE:_N_PE + _N_TR]
    fcw_ref, fcs_ref, fcsh_ref = refs[_N_PE + _N_TR:_N_PE + _N_TR + 3]

    TB, S, C = feat_ref.shape
    pe = _pe_chain(xyz_ref[...].reshape(TB * S, 3), pe_refs)              # (TB*S, C)
    x = feat_ref[...].astype(jnp.float32).reshape(TB * S, C) + pe
    t = _transformer_core(x.reshape(TB, S, C), tr_refs)                   # (TB*S, C)

    pooled = jnp.max(t.reshape(TB, S, C), axis=1)                         # F.max_pool2d over ns
    z = jnp.dot(pooled.astype(jnp.bfloat16), fcw_ref[...],
                preferred_element_type=jnp.float32)
    o_ref[...] = jnp.maximum(z * fcs_ref[...] + fcsh_ref[...], 0.0).astype(o_ref.dtype)


# ---------------------------------------------------------------------------
# Kernel 3: global path -- pe + (y+pe) + transformer + fc + bn_g + relu
#                          + linear2 + bn2 + residual(x) + relu  (final output)
# ---------------------------------------------------------------------------
def _transformer_global_kernel(feat_ref, p_ref, res_ref, *refs):
    o_ref = refs[-1]
    pe_refs = refs[:_N_PE]
    tr_refs = refs[_N_PE:_N_PE + _N_TR]
    (fcw_ref, fcs_ref, fcsh_ref,
     l2w_ref, l2s_ref, l2sh_ref) = refs[_N_PE + _N_TR:_N_PE + _N_TR + 6]

    TB, S, C = feat_ref.shape
    pe = _pe_chain(p_ref[...].reshape(TB * S, 3), pe_refs)
    x = feat_ref[...].astype(jnp.float32).reshape(TB * S, C) + pe
    # TODO(synk): at production S (>=1k points) tile attention over the KV axis (flash pattern)
    # instead of materializing (tb, S, S) score tensors; tb is VMEM-budgeted for now.
    t = _transformer_core(x.reshape(TB, S, C), tr_refs)                   # (TB*S, C)

    z = jnp.dot(t.astype(jnp.bfloat16), fcw_ref[...], preferred_element_type=jnp.float32)
    z = jnp.maximum(z * fcs_ref[...] + fcsh_ref[...], 0.0)                # fc + bn_g + relu
    z = jnp.dot(z.astype(jnp.bfloat16), l2w_ref[...], preferred_element_type=jnp.float32)
    z = z * l2s_ref[...] + l2sh_ref[...] + res_ref[...].reshape(TB * S, C)  # linear2+bn2+resid
    o_ref[...] = jnp.maximum(z, 0.0).reshape(TB, S, C).astype(o_ref.dtype)


# ---------------------------------------------------------------------------
# wrappers: weight repacking + pallas_call plumbing
# ---------------------------------------------------------------------------
def _pe_weight_args(tp, c):
    s1, sh1 = tp["pe_bn"]
    return [tp["pe1_w"], s1.reshape(1, 3), sh1.reshape(1, 3),
            tp["pe2_w"], tp["pe2_b"].reshape(1, c)]


def _transformer_weight_args(tp, nhead):
    """Pre-split qkv / out-projection per head; fold 1/sqrt(dh) into (wq, bq); bf16 matmul weights."""
    D = tp["wo"].shape[0]
    dh = D // nhead
    sc = 1.0 / (dh ** 0.5)
    wqkv, bqkv = tp["wqkv"], tp["bqkv"]

    def heads(w):  # (D, D) with head-major output columns -> (nhead, D, dh)
        return jnp.transpose(w.reshape(D, nhead, dh), (1, 0, 2))

    return [heads(wqkv[:, :D] * sc).astype(jnp.bfloat16), (bqkv[:D] * sc).reshape(nhead, 1, dh),
            heads(wqkv[:, D:2 * D]).astype(jnp.bfloat16), bqkv[D:2 * D].reshape(nhead, 1, dh),
            heads(wqkv[:, 2 * D:]).astype(jnp.bfloat16), bqkv[2 * D:].reshape(nhead, 1, dh),
            tp["wo"].reshape(nhead, dh, D).astype(jnp.bfloat16), tp["bo"].reshape(1, D),
            tp["ln1_g"].reshape(1, D), tp["ln1_b"].reshape(1, D),
            tp["w1"].astype(jnp.bfloat16), tp["b1"].reshape(1, 2 * D),
            tp["w2"].astype(jnp.bfloat16), tp["b2"].reshape(1, D),
            tp["ln2_g"].reshape(1, D), tp["ln2_b"].reshape(1, D)]


def transformer_local(feats, xyz, tp, bn_scale, bn_shift, *, nhead=4, tb_cap=32):
    """relu(bn_l(fc(max_ns(transformer(feats + pe(xyz))))))  -> (Bt, C) bf16."""
    Bt, S, C = feats.shape
    tb = _seq_tile(Bt, S, tb_cap)
    fc_shift = tp["fc_b"] * bn_scale + bn_shift        # fold fc bias into folded BN affine
    w_args = (_pe_weight_args(tp, C)
              + _transformer_weight_args(tp["chunk"], nhead)
              + [tp["fc_w"].astype(jnp.bfloat16),
                 bn_scale.reshape(1, C), fc_shift.reshape(1, C)])
    in_specs = [pl.BlockSpec((tb, S, C), lambda i: (i, 0, 0)),
                pl.BlockSpec((tb, S, 3), lambda i: (i, 0, 0))]
    in_specs += [_bcast_spec(a) for a in w_args]
    return pl.pallas_call(
        _transformer_local_kernel,
        out_shape=jax.ShapeDtypeStruct((Bt, C), jnp.bfloat16),
        grid=(Bt // tb,),
        in_specs=in_specs,
        out_specs=pl.BlockSpec((tb, C), lambda i: (i, 0)),
        compiler_params=pltpu.CompilerParams(dimension_semantics=("parallel",)),
    )(feats, xyz, *w_args)


def transformer_global(feats, p, residual, tp, bn_scale, bn_shift,
                       l2_w, l2_scale, l2_shift, *, nhead=4, tb_cap=8):
    """relu(bn2(linear2(relu(bn_g(fc(transformer(feats + pe(p))))))) + residual) -> (Bt,S,C) f32."""
    Bt, S, C = feats.shape
    tb = _seq_tile(Bt, S, tb_cap)
    fc_shift = tp["fc_b"] * bn_scale + bn_shift
    w_args = (_pe_weight_args(tp, C)
              + _transformer_weight_args(tp["chunk"], nhead)
              + [tp["fc_w"].astype(jnp.bfloat16), bn_scale.reshape(1, C), fc_shift.reshape(1, C),
                 l2_w.astype(jnp.bfloat16), l2_scale.reshape(1, C), l2_shift.reshape(1, C)])
    in_specs = [pl.BlockSpec((tb, S, C), lambda i: (i, 0, 0)),
                pl.BlockSpec((tb, S, 3), lambda i: (i, 0, 0)),
                pl.BlockSpec((tb, S, C), lambda i: (i, 0, 0))]
    in_specs += [_bcast_spec(a) for a in w_args]
    return pl.pallas_call(
        _transformer_global_kernel,
        out_shape=jax.ShapeDtypeStruct((Bt, S, C), jnp.float32),
        grid=(Bt // tb,),
        in_specs=in_specs,
        out_specs=pl.BlockSpec((tb, S, C), lambda i: (i, 0, 0)),
        compiler_params=pltpu.CompilerParams(dimension_semantics=("parallel",)),
    )(feats, p, residual, *w_args)


# ---------------------------------------------------------------------------
# Kernel 4: pairwise squared distances (for KNN grouping), query-row tiled
# ---------------------------------------------------------------------------
def _pdist_kernel(pq_ref, pk_ref, o_ref):
    pq = pq_ref[...]                                          # (tq, 3)
    pk = pk_ref[...]                                          # (N, 3)
    qq = jnp.sum(pq * pq, axis=-1, keepdims=True)             # (tq, 1)
    kk = jnp.sum(pk * pk, axis=-1, keepdims=True)             # (N, 1)
    g = lax.dot_general(pq, pk, (((1,), (1,)), ((), ())),
                        preferred_element_type=jnp.float32)   # (tq, N)
    o_ref[...] = (qq + jnp.transpose(kk) - 2.0 * g).astype(o_ref.dtype)


def pairwise_sqdist(p, *, tq_cap=256):
    B, N, _ = p.shape
    tq = _query_tile(N, min(tq_cap, max(8, N // 2)))
    return pl.pallas_call(
        _pdist_kernel,
        out_shape=jax.ShapeDtypeStruct((B, N, N), jnp.float32),
        grid=(B, N // tq),
        in_specs=[pl.BlockSpec((None, tq, 3), lambda b, i: (b, i, 0)),
                  pl.BlockSpec((None, N, 3), lambda b, i: (b, 0, 0))],
        out_specs=pl.BlockSpec((None, tq, N), lambda b, i: (b, i, 0)),
        compiler_params=pltpu.CompilerParams(dimension_semantics=("parallel", "parallel")),
    )(p, p)


def knn_indices(p, ns):
    d2 = pairwise_sqdist(p)
    # TODO(synk): top-k nearest-neighbor selection (pointops.knnquery) has no clean Pallas
    # equivalent; selection stays in plain JAX glue.
    _, idx = jax.lax.top_k(-d2, ns)                           # (B, N, ns), self included
    return idx


# ---------------------------------------------------------------------------
# Full PointTransformerBlock forward (Pallas path)
# ---------------------------------------------------------------------------
def point_transformer_block(p, x, idx, params):
    """p: (B, N, 3), x: (B, C, N), idx: (B, N, ns) KNN indices. Returns [p, y] with y (B, C, N)."""
    B, C, N = x.shape
    ns = idx.shape[-1]
    xl = jnp.transpose(x, (0, 2, 1))                          # (B, N, C) channels-last
    rows_x = xl.reshape(B * N, C)

    # y = relu(bn1(linear1(x)))  (bf16 rows -> halves gather traffic below)
    y = linear_affine(rows_x, params["linear1_w"], *params["bn1"], relu=True)

    # ---------------- PointTransformerLayer_L (local, KNN-grouped) ----------------
    tl = params["tl"]
    gather = jax.vmap(lambda a, i: a[i])
    # TODO(synk): move the neighbor gather in-kernel (idx via PrefetchScalarGridSpec + manual row
    # DMA) so the ns-expanded (B,N,ns,C) tensor is never materialized in HBM at production N.
    grouped_xyz = gather(p, idx) - p[:, :, None, :]           # (B, N, ns, 3) relative coords
    grouped_feat = gather(y.reshape(B, N, C), idx)            # (B, N, ns, C) bf16
    s_l, sh_l = params["bn_l"]
    y = transformer_local(grouped_feat.reshape(B * N, ns, C),
                          grouped_xyz.reshape(B * N, ns, 3),
                          tl, s_l, sh_l)                      # (B*N, C) bf16

    # ------------- PointTransformerLayer_G (global) + linear2/bn2/residual/relu -------------
    tg = params["tg"]
    s_g, sh_g = params["bn_g"]
    s2, sh2 = params["bn2"]
    y = transformer_global(y.reshape(B, N, C), p, xl, tg, s_g, sh_g,
                           params["linear2_w"], s2, sh2)      # (B, N, C) f32, final

    return [p, jnp.transpose(y, (0, 2, 1))]


# ---------------------------------------------------------------------------
# Deterministic parameter init (weights stored directly in matmul layout (Cin, Cout))
# ---------------------------------------------------------------------------
def init_params(key, c):
    keys = iter(jax.random.split(key, 96))

    def nrm(shape, std=0.1):
        return std * jax.random.normal(next(keys), shape, dtype=jnp.float32)

    def near_one(shape):
        return 1.0 + 0.1 * jax.random.normal(next(keys), shape, dtype=jnp.float32)

    def bn(ch):
        gamma, beta, mean = near_one((ch,)), nrm((ch,)), nrm((ch,))
        var = jax.random.uniform(next(keys), (ch,), dtype=jnp.float32, minval=0.5, maxval=1.5)
        scale = gamma * jax.lax.rsqrt(var + BN_EPS)
        return scale, beta - mean * scale                     # eval-mode BN folded to affine

    def transformer(d):
        f = 2 * d
        return dict(wqkv=nrm((d, 3 * d)), bqkv=nrm((3 * d,)),
                    wo=nrm((d, d)), bo=nrm((d,)),
                    ln1_g=near_one((d,)), ln1_b=nrm((d,)),
                    w1=nrm((d, f)), b1=nrm((f,)),
                    w2=nrm((f, d)), b2=nrm((d,)),
                    ln2_g=near_one((d,)), ln2_b=nrm((d,)))

    def pt_layer():
        return dict(pe1_w=nrm((3, 3)), pe_bn=bn(3), pe2_w=nrm((3, c)), pe2_b=nrm((c,)),
                    chunk=transformer(c), fc_w=nrm((c, c)), fc_b=nrm((c,)))

    return dict(linear1_w=nrm((c, c)), bn1=bn(c),
                tl=pt_layer(), bn_l=bn(c),
                tg=pt_layer(), bn_g=bn(c),
                linear2_w=nrm((c, c)), bn2=bn(c))


# ---------------------------------------------------------------------------
# Pure-JAX f32 reference (no Pallas) for numerical cross-check
# ---------------------------------------------------------------------------
def reference_block(p, x, idx, params, nhead=4):
    B, C, N = x.shape
    ns = idx.shape[-1]

    def lin(z, w, scale, shift, relu):
        o = jnp.dot(z, w, precision=HIGH) * scale + shift
        return jnp.maximum(o, 0.0) if relu else o

    def tlayer(z, tp):
        Bt, S, D = z.shape
        dh = D // nhead
        qkv = jnp.einsum("bsc,cd->bsd", z, tp["wqkv"], precision=HIGH) + tp["bqkv"]
        out = jnp.zeros((Bt, S, D), jnp.float32)
        for h in range(nhead):
            q = qkv[..., h * dh:(h + 1) * dh] / jnp.sqrt(float(dh))
            k = qkv[..., D + h * dh:D + (h + 1) * dh]
            v = qkv[..., 2 * D + h * dh:2 * D + (h + 1) * dh]
            s = jnp.einsum("bqd,bkd->bqk", q, k, precision=HIGH)
            a = jax.nn.softmax(s, axis=-1)
            oh = jnp.einsum("bqk,bkd->bqd", a, v, precision=HIGH)
            out = out + jnp.einsum("bqd,de->bqe", oh, tp["wo"][h * dh:(h + 1) * dh, :],
                                   precision=HIGH)
        out = out + tp["bo"]
        h1 = _layernorm(z + out, tp["ln1_g"], tp["ln1_b"])
        f = jnp.maximum(jnp.einsum("bsc,cf->bsf", h1, tp["w1"], precision=HIGH) + tp["b1"], 0.0)
        f = jnp.einsum("bsf,fc->bsc", f, tp["w2"], precision=HIGH) + tp["b2"]
        return _layernorm(h1 + f, tp["ln2_g"], tp["ln2_b"])

    xl = jnp.transpose(x, (0, 2, 1))
    rows_x = xl.reshape(B * N, C)
    y = lin(rows_x, params["linear1_w"], *params["bn1"], True)

    tl = params["tl"]
    gather = jax.vmap(lambda a, i: a[i])
    gxyz = gather(p, idx) - p[:, :, None, :]
    gfeat = gather(y.reshape(B, N, C), idx)
    pe = lin(gxyz.reshape(-1, 3), tl["pe1_w"], *tl["pe_bn"], True)
    pe = lin(pe, tl["pe2_w"], jnp.ones((C,), jnp.float32), tl["pe2_b"], False)
    feats = (gfeat.reshape(-1, C) + pe).reshape(B * N, ns, C)
    t = tlayer(feats, tl["chunk"])
    pooled = jnp.max(t, axis=1)
    s_l, sh_l = params["bn_l"]
    y = lin(pooled, tl["fc_w"], s_l, tl["fc_b"] * s_l + sh_l, True)

    tg = params["tg"]
    peg = lin(p.reshape(B * N, 3), tg["pe1_w"], *tg["pe_bn"], True)
    peg = lin(peg, tg["pe2_w"], jnp.ones((C,), jnp.float32), tg["pe2_b"], False)
    feats_g = (y + peg).reshape(B, N, C)
    t_g = tlayer(feats_g, tg["chunk"])
    s_g, sh_g = params["bn_g"]
    y = lin(t_g.reshape(B * N, C), tg["fc_w"], s_g, tg["fc_b"] * s_g + sh_g, True)

    s2, sh2 = params["bn2"]
    y = jnp.maximum(jnp.dot(y, params["linear2_w"], precision=HIGH) * s2 + sh2 + rows_x, 0.0)
    return jnp.transpose(y.reshape(B, N, C), (0, 2, 1))


if __name__ == "__main__":
    B, C, N, NS = 2, 32, 64, 8      # batch, channels(d_model, /4 heads), points, neighbors

    key = jax.random.PRNGKey(0)
    kp, kx, kw = jax.random.split(key, 3)
    p = jax.random.normal(kp, (B, N, 3), dtype=jnp.float32)          # point coordinates
    x = 0.1 * jax.random.normal(kx, (B, C, N), dtype=jnp.float32)    # features (PyTorch NCW)
    params = init_params(kw, C)

    idx = knn_indices(p, NS)                                         # Pallas pdist + top_k glue

    p_out, y = jax.jit(point_transformer_block)(p, x, idx, params)
    y = jax.block_until_ready(y)

    assert y.shape == (B, C, N)
    assert bool(jnp.all(jnp.isfinite(y)))

    y_ref = reference_block(p, x, idx, params)
    max_err = float(jnp.max(jnp.abs(y - y_ref)))
    rel_err = float(jnp.linalg.norm(y - y_ref) / (jnp.linalg.norm(y_ref) + 1e-8))
    # bf16 MXU operands + bf16 HBM intermediates + approx softmax reciprocal vs an f32
    # HIGHEST-precision reference: allow a few percent of error.
    assert max_err < 2e-1 and rel_err < 5e-2, \
        f"Pallas vs reference mismatch: max={max_err}, rel={rel_err}"

    print("KERNEL_OK")
</pallas_src>

<mosaic_0001>
module attributes {stable_mosaic.version = 11 : i64} {
  func.func @_pdist_kernel(%arg0: i32, %arg1: i32, %arg2: memref<1x32x3xf32, #tpu.memory_space<vmem>>, %arg3: memref<1x64x3xf32, #tpu.memory_space<vmem>>, %arg4: memref<1x32x64xf32, #tpu.memory_space<vmem>>) attributes {dimension_semantics = [#tpu.dimension_semantics<parallel>, #tpu.dimension_semantics<parallel>], iteration_bounds = array<i64: 2, 2>, scalar_prefetch = 0 : i64, scratch_operands = 0 : i64, tpu.core_type = #tpu.core_type<tc>, window_params = [{transform_indices = @transform_0, window_bounds = array<i64: 1, 32, 3>}, {transform_indices = @transform_1, window_bounds = array<i64: 1, 64, 3>}, {transform_indices = @transform_2, window_bounds = array<i64: 1, 32, 64>}]} {
    %c0 = arith.constant 0 : index
    %c0_0 = arith.constant 0 : index
    %c0_1 = arith.constant 0 : index
    %0 = vector.load %arg2[%c0, %c0_0, %c0_1] : memref<1x32x3xf32, #tpu.memory_space<vmem>>, vector<1x32x3xf32>
    %1 = vector.shape_cast %0 : vector<1x32x3xf32> to vector<32x3xf32>
    %c0_2 = arith.constant 0 : index
    %c0_3 = arith.constant 0 : index
    %c0_4 = arith.constant 0 : index
    %2 = vector.load %arg3[%c0_2, %c0_3, %c0_4] : memref<1x64x3xf32, #tpu.memory_space<vmem>>, vector<1x64x3xf32>
    %3 = vector.shape_cast %2 : vector<1x64x3xf32> to vector<64x3xf32>
    %4 = arith.mulf %1, %1 : vector<32x3xf32>
    %cst = arith.constant dense<0.000000e+00> : vector<32xf32>
    %5 = vector.multi_reduction <add>, %4, %cst [1] : vector<32x3xf32> to vector<32xf32>
    %6 = vector.shape_cast %5 : vector<32xf32> to vector<32x1xf32>
    %7 = arith.mulf %3, %3 : vector<64x3xf32>
    %cst_5 = arith.constant dense<0.000000e+00> : vector<64xf32>
    %8 = vector.multi_reduction <add>, %7, %cst_5 [1] : vector<64x3xf32> to vector<64xf32>
    %9 = vector.shape_cast %8 : vector<64xf32> to vector<64x1xf32>
    %cst_6 = arith.constant dense<0.000000e+00> : vector<32x64xf32>
    %10 = tpu.matmul %1, %3, %cst_6 {dimension_numbers = #tpu.dot_dimension_numbers<[1], [1], [0], [0], [0, 0, 1, 0], [], []>} : vector<32x3xf32>, vector<64x3xf32>, vector<32x64xf32> -> vector<32x64xf32>
    %11 = tpu.transpose %9, [1, 0] : vector<64x1xf32> -> vector<1x64xf32>
    %12 = vector.broadcast %6 : vector<32x1xf32> to vector<32x64xf32>
    %13 = vector.broadcast %11 : vector<1x64xf32> to vector<32x64xf32>
    %14 = arith.addf %12, %13 : vector<32x64xf32>
    %cst_7 = arith.constant 2.000000e+00 : f32
    %15 = vector.broadcast %cst_7 : f32 to vector<32x64xf32>
    %16 = arith.mulf %15, %10 : vector<32x64xf32>
    %17 = arith.subf %14, %16 : vector<32x64xf32>
    %c0_8 = arith.constant 0 : index
    %c0_9 = arith.constant 0 : index
    %c0_10 = arith.constant 0 : index
    %18 = vector.load %arg4[%c0_8, %c0_9, %c0_10] : memref<1x32x64xf32, #tpu.memory_space<vmem>>, vector<1x32x64xf32>
    %19 = vector.shape_cast %18 : vector<1x32x64xf32> to vector<32x64xf32>
    %20 = vector.shape_cast %17 : vector<32x64xf32> to vector<1x32x64xf32>
    tpu.vector_store %arg4[%c0_8, %c0_9, %c0_10], %20 {strides = array<i32>} : memref<1x32x64xf32, #tpu.memory_space<vmem>>, vector<1x32x64xf32>,
    return
  }
  func.func @transform_0(%arg0: i32, %arg1: i32) -> (i32, i32, i32) {
    %c0_i32 = arith.constant 0 : i32
    %c0_i32_0 = arith.constant 0 : i32
    return %arg0, %arg1, %c0_i32 : i32, i32, i32
  }
  func.func @transform_1(%arg0: i32, %arg1: i32) -> (i32, i32, i32) {
    %c0_i32 = arith.constant 0 : i32
    %c0_i32_0 = arith.constant 0 : i32
    %c0_i32_1 = arith.constant 0 : i32
    return %arg0, %c0_i32, %c0_i32_0 : i32, i32, i32
  }
  func.func @transform_2(%arg0: i32, %arg1: i32) -> (i32, i32, i32) {
    %c0_i32 = arith.constant 0 : i32
    %c0_i32_0 = arith.constant 0 : i32
    return %arg0, %arg1, %c0_i32 : i32, i32, i32
  }
}

</mosaic_0001>

<llo_original>
// kernel: tpu_custom_call.1
$region0: #{tpu_custom_call.1}
  #allocation0 [shape = 'u32[]', space=smem, size = 0x4, offset = 0x4, fixed_abs, tag = 'smem constant byte address 0x4 - core index']
  #allocation1 [shape = 'u32[144,128]{1,0:T(1,128)}', space=vmem, size = 0x12000, scoped, tag = 'internal scratch']
  %s0 = inlined_call_operand.vmem [shape: f32[2,64,3], index: 0, kind: input, shape index: {}]
  %s1 = inlined_call_operand.vmem [shape: f32[2,64,3], index: 1, kind: input, shape index: {}]
  %s2 = inlined_call_operand.hbm [shape: f32[2,64,64], index: 2, kind: output, shape index: {}]
  %s3 = sld [smem:[#allocation0]]
  $region41: #{tpu_custom_call.1} parent=0
    _
  %s5 = ssub.s32 1, %s3
  %s6 = scalar_select 0, %s5, %s3
  $region1: #{tpu_custom_call.1} parent=0
    #allocation2 [shape = 'u8[32768]{0}', space=vmem, size = 0x8000, scoped, tag = 'output window, operand 0']
    #allocation3 [shape = 's32[2]{0}', space=sflag, size = 0x8, scoped, tag = 'scoped memory for tpu_custom_call.1']
    %7 = vsyncpa [#allocation3], 0
    %s8 = scalar_lea.sflag [#allocation3], 1
    %9 = vsyncpa %s8, 0
    loop: start=0, step=1, limit=6
    $region2: #{tpu_custom_call.1} parent=1 // loop_pre_header
      _
    $region3: #{tpu_custom_call.1} parent=1 // loop_header
      %s11 = sphi 0, %s15
      %p12 = scmp.ge.s32.totalorder %s11, 6
      %s18 = sphi 0, %s30
      %s19 = sphi 0, %s26
      %s20 = sphi 0, %s18
      %s21 = sphi 0, %s19
      %s22 = sphi 0, %s20
      %s23 = sphi 0, %s21
      %s35 = sphi 0, %s37
      %s38 = sphi 0, %s35
      %s39 = sphi 0, %s38
      %s55 = sphi 0, %s39
      %s61 = sphi 0, %s63
      %s64 = sphi 0, %s61
      %s65 = sphi 0, %s64
      %s81 = sphi 0, %s65
      %s89 = sphi 0, %s91
      %s92 = sphi 0, %s89
      %s93 = sphi 0, %s92
      %s109 = sphi 0, %s93
    $region4: #{tpu_custom_call.1} parent=1 // loop_header_branch
      %14 = sbr.rel (%p12) target = $region8
    $region5: #{tpu_custom_call.1} parent=1 // loop_body
      %s16 = ssub.s32 %s11, 1
      %s17 = ssub.s32 %s11, 2
      %s24 = sadd.s32 1, %s19
      %p25 = scmp.ge.s32.totalorder %s24, 2
      %s26 = scalar_select %p25, 0, %s24
      %s27 = sadd.s32 1, %s18
      %s28 = scalar_select %p25, %s27, %s18
      %p29 = scmp.ge.s32.totalorder %s28, 2
      %s30 = scalar_select %p29, 0, %s28
      %s31 = ssub.s32 %s18, %s30
      %s32 = ssub.s32 %s19, %s26
      %s33 = sor.u32 %s31, %s32
      %p34 = scmp.eq.s32.totalorder %s33, 0
      %s36 = sadd.s32 %s35, 1
      %s37 = scalar_select %p34, %s35, %s36
      %p40 = pneg %p34
      %p41 = scmp.eq.s32.totalorder %s11, 3
      %p42 = por %p40, %p41
      %p43 = scmp.ne.s32.totalorder %s35, %s38
      %p44 = scmp.eq.s32.totalorder %s11, 0
      %p45 = por %p43, %p44
      %p46 = scmp.ne.s32.totalorder %s35, %s38
      %p47 = scmp.eq.s32.totalorder %s16, 3
      %p48 = por %p46, %p47
      %p49 = scmp.ne.s32.totalorder %s38, %s39
      %p50 = scmp.eq.s32.totalorder %s16, 0
      %p51 = por %p49, %p50
      %p52 = scmp.ne.s32.totalorder %s38, %s39
      %p53 = scmp.eq.s32.totalorder %s17, 3
      %p54 = por %p52, %p53
      %p56 = scmp.ne.s32.totalorder %s39, %s55
      %p57 = scmp.eq.s32.totalorder %s17, 0
      %p58 = por %p56, %p57
      %s59 = ssub.s32 %s18, %s30
      %p60 = scmp.eq.s32.totalorder %s59, 0
      %s62 = sadd.s32 %s61, 1
      %s63 = scalar_select %p60, %s61, %s62
      %p66 = pneg %p60
      %p67 = scmp.eq.s32.totalorder %s11, 3
      %p68 = por %p66, %p67
      %p69 = scmp.ne.s32.totalorder %s61, %s64
      %p70 = scmp.eq.s32.totalorder %s11, 0
      %p71 = por %p69, %p70
      %p72 = scmp.ne.s32.totalorder %s61, %s64
      %p73 = scmp.eq.s32.totalorder %s16, 3
      %p74 = por %p72, %p73
      %p75 = scmp.ne.s32.totalorder %s64, %s65
      %p76 = scmp.eq.s32.totalorder %s16, 0
      %p77 = por %p75, %p76
      %p78 = scmp.ne.s32.totalorder %s64, %s65
      %p79 = scmp.eq.s32.totalorder %s17, 3
      %p80 = por %p78, %p79
      %p82 = scmp.ne.s32.totalorder %s65, %s81
      %p83 = scmp.eq.s32.totalorder %s17, 0
      %p84 = por %p82, %p83
      %s85 = ssub.s32 %s18, %s30
      %s86 = ssub.s32 %s19, %s26
      %s87 = sor.u32 %s85, %s86
      %p88 = scmp.eq.s32.totalorder %s87, 0
      %s90 = sadd.s32 %s89, 1
      %s91 = scalar_select %p88, %s89, %s90
      %p94 = pneg %p88
      %p95 = scmp.eq.s32.totalorder %s11, 3
      %p96 = por %p94, %p95
      %p97 = scmp.ne.s32.totalorder %s89, %s92
      %p98 = scmp.eq.s32.totalorder %s11, 0
      %p99 = por %p97, %p98
      %p100 = scmp.ne.s32.totalorder %s89, %s92
      %p101 = scmp.eq.s32.totalorder %s16, 3
      %p102 = por %p100, %p101
      %p103 = scmp.ne.s32.totalorder %s92, %s93
      %p104 = scmp.eq.s32.totalorder %s16, 0
      %p105 = por %p103, %p104
      %p106 = scmp.ne.s32.totalorder %s92, %s93
      %p107 = scmp.eq.s32.totalorder %s17, 3
      %p108 = por %p106, %p107
      %p110 = scmp.ne.s32.totalorder %s93, %s109
      %p111 = scmp.eq.s32.totalorder %s17, 0
      %p112 = por %p110, %p111
      %p113 = scmp.le.s32.totalorder 1, %s11
      %p114 = scmp.lt.s32.totalorder %s11, 5
      %p115 = pnand %p113, %p114
      %p116 = pneg %p115
      // Predicated region
      $region9: #{tpu_custom_call.1} parent=5 // pred_check
        _
      $region10: #{tpu_custom_call.1} parent=5 // pred_check_branch
        %118 = sbr.rel (%p115) target = $region12
      $region11: #{tpu_custom_call.1} parent=5 // pred_region
        %s119 = ssub.s32 %s11, 1
      $region12: #{tpu_custom_call.1} parent=5 // pred_fallthru
        _
      %p120 = scmp.lt.s32.totalorder %s11, 4
      // Predicated region
      $region13: #{tpu_custom_call.1} parent=5 // pred_check
        %p121 = pneg %p120
      $region14: #{tpu_custom_call.1} parent=5 // pred_check_branch
        %123 = sbr.rel (%p121) target = $region16
      $region15: #{tpu_custom_call.1} parent=5 // pred_region
        // Predicated region
        $region17: #{tpu_custom_call.1} parent=15 // pred_check
          %p124 = pneg %p45
        $region18: #{tpu_custom_call.1} parent=15 // pred_check_branch
          %126 = sbr.rel (%p124) target = $region20
        $region19: #{tpu_custom_call.1} parent=15 // pred_region
          %s127 = smul.u32 4, %s19
          %p128 = scmp.lt.s32.totalorder %s18, 1
          %s129 = scalar_select %p128, %s18, 1
          %p130 = scmp.lt.s32.totalorder %s127, 7
          %s131 = scalar_select %p130, %s127, 7
          %s132 = smul.addr %s129, 8
          %s133 = sadd.s32 %s131, %s132
          %s134 = smul.addr %s133, 8
          %s135 = scalar_lea.vmem %s0, %s134
          %s136 = smul.u32 4, %s19
        $region20: #{tpu_custom_call.1} parent=15 // pred_fallthru
          _
        // Predicated region
        $region21: #{tpu_custom_call.1} parent=15 // pred_check
          %p137 = pneg %p71
        $region22: #{tpu_custom_call.1} parent=15 // pred_check_branch
          %139 = sbr.rel (%p137) target = $region24
        $region23: #{tpu_custom_call.1} parent=15 // pred_region
          %p140 = scmp.lt.s32.totalorder %s18, 1
          %s141 = scalar_select %p140, %s18, 1
          %s142 = smul.addr %s141, 8
          %s143 = smul.addr %s142, 8
          %s144 = scalar_lea.vmem %s1, %s143
        $region24: #{tpu_custom_call.1} parent=15 // pred_fallthru
          _
      $region16: #{tpu_custom_call.1} parent=5 // pred_fallthru
        _
      %p145 = scmp.le.s32.totalorder 1, %s11
      %p146 = scmp.lt.s32.totalorder %s11, 5
      %p147 = pnand %p145, %p146
      %p148 = pneg %p147
      // Predicated region
      $region25: #{tpu_custom_call.1} parent=5 // pred_check
        _
      $region26: #{tpu_custom_call.1} parent=5 // pred_check_branch
        %150 = sbr.rel (%p147) target = $region28
      $region27: #{tpu_custom_call.1} parent=5 // pred_region
        %s151 = ssub.s32 %s11, 1
        %s152 = smul.u32 4, %s21
        %p153 = scmp.lt.s32.totalorder %s20, 1
        %s154 = scalar_select %p153, %s20, 1
        %p155 = scmp.lt.s32.totalorder %s152, 7
        %s156 = scalar_select %p155, %s152, 7
        %s157 = smul.addr %s154, 8
        %s158 = sadd.s32 %s156, %s157
        %s159 = smul.addr %s158, 8
        %s160 = scalar_lea.vmem %s0, %s159
        %p161 = pneg %p51
        %p162 = pneg %p48
        %p163 = scmp.lt.s32.totalorder %s20, 1
        %s164 = scalar_select %p163, %s20, 1
        %s165 = smul.addr %s164, 8
        %s166 = smul.addr %s165, 8
        %s167 = scalar_lea.vmem %s1, %s166
        %p168 = pneg %p77
        %p169 = pneg %p74
        %p170 = pneg %p105
        %p171 = pneg %p102
        %s172 = sand.u32 %s92, 1
        %s173 = scalar_lea.sflag [#allocation3], %s172
        %s174 = sand.u32 %s92, 1
        %s175 = smul.addr %s174, 32
        %s176 = scalar_lea.vmem [#allocation2], %s175
        %s177 = smul.u32 4, %s21
        %p178 = scmp.lt.s32.totalorder %s20, 1
        %s179 = scalar_select %p178, %s20, 1
        %p180 = scmp.lt.s32.totalorder %s177, 7
        %s181 = scalar_select %p180, %s177, 7
        %s182 = smul.addr %s179, 8
        %s183 = sadd.s32 %s181, %s182
        %s184 = smul.addr %s183, 8
        %s185 = scalar_lea.vmem %s0, %s184
        %s186 = smul.u32 4, %s21
        %p187 = scmp.lt.s32.totalorder %s20, 1
        %s188 = scalar_select %p187, %s20, 1
        %s189 = smul.addr %s188, 8
        %s190 = smul.addr %s189, 8
        %s191 = scalar_lea.vmem %s1, %s190
        %s192 = smul.u32 4, %s21
        %v193 = vld [vmem:[%s185] sm:$0xff]
        %v194 = vld [vmem:[%s185 + $0x8] sm:$0xff]
        %v195 = vld [vmem:[%s185 + $0x10] sm:$0xff]
        %v196 = vld [vmem:[%s185 + $0x18] sm:$0xff]
        %v197 = vld [vmem:[%s191] sm:$0xff]
        %v198 = vld [vmem:[%s191 + $0x8] sm:$0xff]
        %v199 = vld [vmem:[%s191 + $0x10] sm:$0xff]
        %v200 = vld [vmem:[%s191 + $0x18] sm:$0xff]
        %v201 = vld [vmem:[%s191 + $0x20] sm:$0xff]
        %v202 = vld [vmem:[%s191 + $0x28] sm:$0xff]
        %v203 = vld [vmem:[%s191 + $0x30] sm:$0xff]
        %v204 = vld [vmem:[%s191 + $0x38] sm:$0xff]
        %v205 = vmul.f32 %v193, %v193
        %v206 = vmul.f32 %v194, %v194
        %v207 = vmul.f32 %v195, %v195
        %v208 = vmul.f32 %v196, %v196
        %vm209 = vcmask 23552
        %v210 = vsel %vm209, %v205, 0.0
        %211 = vadd.xlane.f32.xlu0 %v210
        %v212 = vpop.xlane.xlu0 %211
        %v213 = vsel %vm209, %v206, 0.0
        %214 = vadd.xlane.f32.xlu0 %v213
        %v215 = vpop.xlane.xlu0 %214
        %v216 = vsel %vm209, %v207, 0.0
        %217 = vadd.xlane.f32.xlu0 %v216
        %v218 = vpop.xlane.xlu0 %217
        %v219 = vsel %vm209, %v208, 0.0
        %220 = vadd.xlane.f32.xlu0 %v219
        %v221 = vpop.xlane.xlu0 %220
        %v222 = vmul.f32 %v197, %v197
        %v223 = vmul.f32 %v198, %v198
        %v224 = vmul.f32 %v199, %v199
        %v225 = vmul.f32 %v200, %v200
        %v226 = vmul.f32 %v201, %v201
        %v227 = vmul.f32 %v202, %v202
        %v228 = vmul.f32 %v203, %v203
        %v229 = vmul.f32 %v204, %v204
        %v230 = vsel %vm209, %v222, 0.0
        %231 = vadd.xlane.f32.xlu0 %v230
        %v232 = vpop.xlane.xlu0 %231
        %v233 = vsel %vm209, %v223, 0.0
        %234 = vadd.xlane.f32.xlu0 %v233
        %v235 = vpop.xlane.xlu0 %234
        %v236 = vsel %vm209, %v224, 0.0
        %237 = vadd.xlane.f32.xlu0 %v236
        %v238 = vpop.xlane.xlu0 %237
        %v239 = vsel %vm209, %v225, 0.0
        %240 = vadd.xlane.f32.xlu0 %v239
        %v241 = vpop.xlane.xlu0 %240
        %v242 = vsel %vm209, %v226, 0.0
        %243 = vadd.xlane.f32.xlu0 %v242
        %v244 = vpop.xlane.xlu0 %243
        %v245 = vsel %vm209, %v227, 0.0
        %246 = vadd.xlane.f32.xlu0 %v245
        %v247 = vpop.xlane.xlu0 %246
        %v248 = vsel %vm209, %v228, 0.0
        %249 = vadd.xlane.f32.xlu0 %v248
        %v250 = vpop.xlane.xlu0 %249
        %v251 = vsel %vm209, %v229, 0.0
        %252 = vadd.xlane.f32.xlu0 %v251
        %v253 = vpop.xlane.xlu0 %252
        %v255 = vsel %vm209, %v193, 0
        %v258 = vsel %vm209, %v194, 0
        %v261 = vsel %vm209, %v195, 0
        %v264 = vsel %vm209, %v196, 0
        %v267 = vsel %vm209, %v197, 0
        %v270 = vsel %vm209, %v198, 0
        %v273 = vsel %vm209, %v199, 0
        %v276 = vsel %vm209, %v200, 0
        %v279 = vsel %vm209, %v201, 0
        %v282 = vsel %vm209, %v202, 0
        %v285 = vsel %vm209, %v203, 0
        %v288 = vsel %vm209, %v204, 0
        %290 = vmatprep.subr.mxu0 0.0
        %291 = vmatpush1.xpose.msra.mxu0 %v267
        %292 = vmatprep.subr.mxu0 0.0
        %293 = vmatpush1.xpose.msra.mxu0 %v270
        %294 = vmatprep.subr.mxu0 0.0
        %295 = vmatpush1.xpose.msra.mxu0 %v273
        %296 = vmatprep.subr.mxu0 0.0
        %297 = vmatpush1.xpose.msra.mxu0 %v276
        %298 = vmatprep.subr.mxu0 0.0
        %299 = vmatpush1.xpose.msra.mxu0 %v279
        %300 = vmatprep.subr.mxu0 0.0
        %301 = vmatpush1.xpose.msra.mxu0 %v282
        %302 = vmatprep.subr.mxu0 0.0
        %303 = vmatpush1.xpose.msra.mxu0 %v285
        %304 = vmatprep.subr.mxu0 0.0
        %305 = vmatpush1.xpose.msra.mxu0 %v288
        %306 = vmatprep.subr.mxu0 0.0
        %307 = vmatpush1.xpose.msra.mxu0 0.0
        %308 = vmatprep.subr.mxu0 0.0
        %309 = vmatpush1.xpose.msra.mxu0 0.0
        %310 = vmatprep.subr.mxu0 0.0
        %311 = vmatpush1.xpose.msra.mxu0 0.0
        %312 = vmatprep.subr.mxu0 0.0
        %313 = vmatpush1.xpose.msra.mxu0 0.0
        %314 = vmatprep.subr.mxu0 0.0
        %315 = vmatpush1.xpose.msra.mxu0 0.0
        %316 = vmatprep.subr.mxu0 0.0
        %317 = vmatpush1.xpose.msra.mxu0 0.0
        %318 = vmatprep.subr.mxu0 0.0
        %319 = vmatpush1.xpose.msra.mxu0 0.0
        %320 = vmatprep.subr.mxu0 0.0
        %321 = vmatpush1.xpose.msra.mxu0 0.0
        %322 = vmatprep.subr.mxu0 0.0
        %323 = vmatpush1.xpose.msra.mxu0 0.0
        %324 = vmatprep.subr.mxu0 0.0
        %325 = vmatpush1.xpose.msra.mxu0 0.0
        %326 = vmatprep.subr.mxu0 0.0
        %327 = vmatpush1.xpose.msra.mxu0 0.0
        %328 = vmatprep.subr.mxu0 0.0
        %329 = vmatpush1.xpose.msra.mxu0 0.0
        %330 = vmatprep.subr.mxu0 0.0
        %331 = vmatpush1.xpose.msra.mxu0 0.0
        %332 = vmatprep.subr.mxu0 0.0
        %333 = vmatpush1.xpose.msra.mxu0 0.0
        %334 = vmatprep.subr.mxu0 0.0
        %335 = vmatpush1.xpose.msra.mxu0 0.0
        %336 = vmatprep.subr.mxu0 0.0
        %337 = vmatpush1.xpose.msra.mxu0 0.0
        %338 = vmatprep.subr.mxu0 0.0
        %339 = vmatpush1.xpose.msra.mxu0 0.0
        %340 = vmatprep.subr.mxu0 0.0
        %341 = vmatpush1.xpose.msra.mxu0 0.0
        %342 = vmatprep.subr.mxu0 0.0
        %343 = vmatpush1.xpose.msra.mxu0 0.0
        %344 = vmatprep.subr.mxu0 0.0
        %345 = vmatpush1.xpose.msra.mxu0 0.0
        %346 = vmatprep.subr.mxu0 0.0
        %347 = vmatpush1.xpose.msra.mxu0 0.0
        %348 = vmatprep.subr.mxu0 0.0
        %349 = vmatpush1.xpose.msra.mxu0 0.0
        %350 = vmatprep.subr.mxu0 0.0
        %351 = vmatpush1.xpose.msra.mxu0 0.0
        %352 = vmatprep.subr.mxu0 0.0
        %353 = vmatpush1.xpose.msra.mxu0 0.0
        %354 = vmatprep.mubr.f32.mxu0 0.0
        %355 = vmatmul.mubr.f32.gmra.mrb[0].mxu0 %v255
        %v356 = vpop.f32.mrb[0].mxu0
        %v357 = vadd.f32 0.0, %v356
        %v358 = vpop.f32.mrb[0].mxu0
        %359 = vmatprep.mubr.f32.mxu0 0.0
        %360 = vmatmul.mubr.f32.gmra.mrb[0].mxu0 %v258
        %v361 = vpop.f32.mrb[0].mxu0
        %v362 = vadd.f32 0.0, %v361
        %v363 = vpop.f32.mrb[0].mxu0
        %364 = vmatprep.mubr.f32.mxu0 0.0
        %365 = vmatmul.mubr.f32.gmra.mrb[0].mxu0 %v261
        %v366 = vpop.f32.mrb[0].mxu0
        %v367 = vadd.f32 0.0, %v366
        %v368 = vpop.f32.mrb[0].mxu0
        %369 = vmatprep.mubr.f32.mxu0 0.0
        %370 = vmatmul.mubr.f32.gmra.mrb[0].mxu0 %v264
        %v371 = vpop.f32.mrb[0].mxu0
        %v372 = vadd.f32 0.0, %v371
        %v373 = vpop.f32.mrb[0].mxu0
        %374 = vdwg.mxu0
        %375 = vxpose.xlu0.b32.start [1/16] %v232, 128
        %376 = vxpose.xlu0.b32.cont [2/16] %v235, 128
        %377 = vxpose.xlu0.b32.cont [3/16] %v238, 128
        %378 = vxpose.xlu0.b32.cont [4/16] %v241, 128
        %379 = vxpose.xlu0.b32.cont [5/16] %v244, 128
        %380 = vxpose.xlu0.b32.cont [6/16] %v247, 128
        %381 = vxpose.xlu0.b32.cont [7/16] %v250, 128
        %382 = vxpose.xlu0.b32.cont [8/16] %v253, 128
        %383 = vxpose.xlu0.b32.cont [9/16] 0.0, 128
        %384 = vxpose.xlu0.b32.cont [10/16] 0.0, 128
        %385 = vxpose.xlu0.b32.cont [11/16] 0.0, 128
        %386 = vxpose.xlu0.b32.cont [12/16] 0.0, 128
        %387 = vxpose.xlu0.b32.cont [13/16] 0.0, 128
        %388 = vxpose.xlu0.b32.cont [14/16] 0.0, 128
        %389 = vxpose.xlu0.b32.cont [15/16] 0.0, 128
        %390 = vxpose.xlu0.b32.end [16/16] 0.0, 128
        %v391 = vpop.trf.xlu0
        %v392 = vpop.trf.xlu0
        %v393 = vpop.trf.xlu0
        %v394 = vpop.trf.xlu0
        %v395 = vpop.trf.xlu0
        %v396 = vpop.trf.xlu0
        %v397 = vpop.trf.xlu0
        %v398 = vpop.trf.xlu0
        %v399 = vpop.trf.xlu0
        %v400 = vpop.trf.xlu0
        %v401 = vpop.trf.xlu0
        %v402 = vpop.trf.xlu0
        %v403 = vpop.trf.xlu0
        %v404 = vpop.trf.xlu0
        %v405 = vpop.trf.xlu0
        %v406 = vpop.trf.xlu0
        %v407 = vlaneseq
        %v408 = vshrl.u32 %v407, 7
        %v409 = vsub.s32 0, %v408
        %v410 = vrot.slane %v391, %v409
        %v411 = vadd.f32 %v212, %v410
        %v412 = vadd.f32 %v215, %v410
        %v413 = vadd.f32 %v218, %v410
        %v414 = vadd.f32 %v221, %v410
        %v415 = vmul.f32 %v357, 2.0
        %v416 = vmul.f32 %v362, 2.0
        %v417 = vmul.f32 %v367, 2.0
        %v418 = vmul.f32 %v372, 2.0
        %v419 = vsub.f32 %v411, %v415
        %v420 = vsub.f32 %v412, %v416
        %v421 = vsub.f32 %v413, %v417
        %v422 = vsub.f32 %v414, %v418
        %vm423 = vcmask 523264
        %424 = vst.msk [vmem:[%s176] sm:$0xff] %vm423, %v419
        %425 = vst.msk [vmem:[%s176 + $0x8] sm:$0xff] %vm423, %v420
        %426 = vst.msk [vmem:[%s176 + $0x10] sm:$0xff] %vm423, %v421
        %427 = vst.msk [vmem:[%s176 + $0x18] sm:$0xff] %vm423, %v422
        %s428 = sand.u32 %s92, 1
        %s429 = scalar_lea.sflag [#allocation3], %s428
        %s430 = sand.u32 %s92, 1
        %s431 = smul.addr %s430, 32
        %s432 = scalar_lea.vmem [#allocation2], %s431
        // Predicated region
        $region29: #{tpu_custom_call.1} parent=27 // pred_check
          %p433 = pneg %p102
        $region30: #{tpu_custom_call.1} parent=27 // pred_check_branch
          %435 = sbr.rel (%p433) target = $region32
        $region31: #{tpu_custom_call.1} parent=27 // pred_region
          %s436 = smul.u32 4, %s21
          %s438 = ssub.s32 512, 512
          %439 = vsyncadd %s429, %s438
          %s440 = smul.addr %s20, 8
          %s441 = sadd.s32 %s436, %s440
          %s442 = smul.addr %s441, 128
          %s443 = scalar_lea.hbm %s2, %s442
          %s444 = sshll.u32 %s432, 4
          %s445 = int_to_ptr.vmem [resolvable:$true] %s444
          %450 = dma.vmem_to_hbm [thread:$0]  %s445, 512, %s443, %s429, 128, 128, 8
        $region32: #{tpu_custom_call.1} parent=27 // pred_fallthru
          _
      $region28: #{tpu_custom_call.1} parent=5 // pred_fallthru
        _
      %p451 = scmp.le.s32.totalorder 2, %s11
      // Predicated region
      $region33: #{tpu_custom_call.1} parent=5 // pred_check
        %p452 = pneg %p451
      $region34: #{tpu_custom_call.1} parent=5 // pred_check_branch
        %454 = sbr.rel (%p452) target = $region36
      $region35: #{tpu_custom_call.1} parent=5 // pred_region
        %s455 = ssub.s32 %s11, 2
        // Predicated region
        $region37: #{tpu_custom_call.1} parent=35 // pred_check
          %p456 = pneg %p108
        $region38: #{tpu_custom_call.1} parent=35 // pred_check_branch
          %458 = sbr.rel (%p456) target = $region40
        $region39: #{tpu_custom_call.1} parent=35 // pred_region
          %s459 = sand.u32 %s93, 1
          %s460 = scalar_lea.sflag [#allocation3], %s459
          %s461 = sand.u32 %s93, 1
          %s462 = smul.addr %s461, 32
          %s463 = scalar_lea.vmem [#allocation2], %s462
          %464 = dma.done %s460, 512
        $region40: #{tpu_custom_call.1} parent=35 // pred_fallthru
          _
      $region36: #{tpu_custom_call.1} parent=5 // pred_fallthru
        _
    $region6: #{tpu_custom_call.1} parent=1 // loop_footer
      %s15 = sadd.s32 1, %s11
    $region7: #{tpu_custom_call.1} parent=1 // loop_footer_branch
      %10 = sbr.rel target = $region3
    $region8: #{tpu_custom_call.1} parent=1 // loop_exit
      _
    %465 = vsyncpa [#allocation3], 1
    %s466 = scalar_lea.sflag [#allocation3], 1
    %467 = vsyncpa %s466, 1

</llo_original>
